<compile_context>
chip_gen: v6e
topology: v6e:2x2x1
jax: 0.10.0
libtpu: 0.0.40
codegen_flags: <defaults>
</compile_context>

<pallas_src>
import math
import functools

import jax
import jax.numpy as jnp
from jax import lax
from jax.experimental import pallas as pl
from jax.experimental.pallas import tpu as pltpu


# --------------------------- small shared helpers ---------------------------

def _roll_last(x, shift):
    """jnp.roll along the last axis with a STATIC shift: out[..., j] = x[..., (j-shift)%L].

    Written as static slices + concatenate so it lowers for any lane width
    (no reliance on strided/dynamic rotate support at small L)."""
    L = x.shape[-1]
    shift = shift % L
    if shift == 0:
        return x
    return jnp.concatenate([x[..., L - shift:], x[..., :L - shift]], axis=-1)


def _pick_batch_tile(B):
    # Several batch elements per grid step amortize the ~0.35us/step overhead and
    # keep (bt, L) output blocks sublane-legal: bt must divide B and be a multiple
    # of 8 (or equal B).  For very large L on v7x (64 MiB VMEM) shrink bt first.
    return 8 if B % 8 == 0 else B


# --------------------------- tiled linear (x @ w.T + b) ---------------------

def _linear_kernel(x_ref, w_ref, b_ref, o_ref):
    # x: (tm, K), w: (N, K) torch nn.Linear layout, b: (1, N).
    # bf16 operands on the MXU, f32 accumulation, f32 bias add on the VPU.
    x = x_ref[...].astype(jnp.bfloat16)
    w = w_ref[...].astype(jnp.bfloat16)
    y = lax.dot_general(x, w, (((1,), (1,)), ((), ())),
                        preferred_element_type=jnp.float32)
    o_ref[...] = (y + b_ref[...]).astype(o_ref.dtype)


def pallas_linear(x, w, b, *, tm=512):
    """y = x @ w.T + b, tiled over rows of x; weight/bias blocks stay resident.

    tm=512 keeps the per-step working set (x tile + fused-QKV weight + out tile,
    double-buffered) under the default scoped-VMEM limits (16 MiB v5e / 32 MiB
    v6e-v7x) and well under v7x's 64 MiB physical VMEM."""
    M, K = x.shape
    N = w.shape[0]
    if M <= tm:
        tm_eff, Mp = M, M
    else:
        tm_eff = max(8, (tm // 8) * 8)
        Mp = pl.cdiv(M, tm_eff) * tm_eff
    xp = jnp.pad(x, ((0, Mp - M), (0, 0))) if Mp != M else x

    out = pl.pallas_call(
        _linear_kernel,
        out_shape=jax.ShapeDtypeStruct((Mp, N), jnp.float32),
        grid=(Mp // tm_eff,),
        in_specs=[pl.BlockSpec((tm_eff, K), lambda i: (i, 0)),
                  pl.BlockSpec((N, K), lambda i: (0, 0)),
                  pl.BlockSpec((1, N), lambda i: (0, 0))],
        out_specs=pl.BlockSpec((tm_eff, N), lambda i: (i, 0)),
        compiler_params=pltpu.CompilerParams(
            dimension_semantics=("parallel",)),      # shards across v7x's 2 TCs
    )(xp, w, b.reshape(1, N))
    return out[:M]


# ---------------- circular autocorrelation (mean over heads/channels) -------

def _corr_mean_kernel(q_ref, kr_ref, mv_ref, *, L, inv_d, n_bits):
    """mean_value[b, tau] = (1/d) * sum_t <q[b,t,:], k[b,(t-tau)%L,:]>.

    q_ref:  (bt, L, d) query projection block
    kr_ref: (bt, L, d) key projection block, TIME-REVERSED by the wrapper
    mv_ref: (bt, L)    output (lane-dense for realistic L >= 128)
    """
    q = q_ref[...].astype(jnp.bfloat16)
    kr = kr_ref[...].astype(jnp.bfloat16)
    # Batched Gram on the MXU (f32 accumulation): g[b,t,s] = <q[b,t,:], k[b,L-1-s,:]>
    g = lax.dot_general(q, kr, (((2,), (2,)), ((0,), (0,))),
                        preferred_element_type=jnp.float32)          # (bt, L, L)

    # Shear: roll row t by +t so column c holds g[b,t,(c-t)%L] = <q[b,t], k[b,(t-c-1)%L]>.
    # Per-row roll decomposed over the bits of t: ceil(log2(L)) static rolls + selects
    # instead of L masked full reductions.
    row = lax.broadcasted_iota(jnp.int32, g.shape, 1)
    for j in range(n_bits):
        rolled = _roll_last(g, (1 << j) % L)
        g = jnp.where(((row >> j) & 1) == 1, rolled, g)

    colsum = jnp.sum(g, axis=1)                                      # (bt, L)
    # colsum[b, c] = sum_t <q[b,t], k[b,(t-(c+1))%L]>  ->  shift lanes by one.
    mv_ref[...] = _roll_last(colsum, 1) * inv_d


def pallas_corr_mean(q, k):
    """Circular cross-correlation of q and k averaged over all H*E channels."""
    B, L, d = q.shape
    bt = _pick_batch_tile(B)
    kr = k[:, ::-1, :]          # time-reverse once in XLA (cheap glue, outside kernel)
    kern = functools.partial(_corr_mean_kernel, L=L, inv_d=1.0 / d,
                             n_bits=(L - 1).bit_length())
    return pl.pallas_call(
        kern,
        out_shape=jax.ShapeDtypeStruct((B, L), jnp.float32),
        grid=(B // bt,),
        in_specs=[pl.BlockSpec((bt, L, d), lambda i: (i, 0, 0)),
                  pl.BlockSpec((bt, L, d), lambda i: (i, 0, 0))],
        out_specs=pl.BlockSpec((bt, L), lambda i: (i, 0)),
        compiler_params=pltpu.CompilerParams(
            dimension_semantics=("parallel",)),
    )(q, kr)


# -------- fused time-delay aggregation + output projection (scalar prefetch) --------

def _agg_out_kernel(delay_ref, corr_ref, v_ref, wo_ref, bo_ref, o_ref, v2_ref,
                    *, L, top_k, bt):
    """out[b,t,:] = (sum_i corr[b,i] * v[b,(t+delay[b,i])%L,:]) @ wo.T + bo.

    delay_ref: (B, top_k) int32   -- scalar-prefetched into SMEM
    corr_ref:  (B, top_k) float32 -- softmax weights, SMEM-resident input
    v_ref:     (bt, L, Dv) value block;  wo_ref: (d_model, Dv);  bo_ref: (1, d_model)
    v2_ref:    (bt, 2L, Dv) VMEM scratch -- time-doubled V so a circular shift
               becomes a single contiguous pl.ds slice (no one-hot matrices).
    """
    bi = pl.program_id(0)
    v = v_ref[...]
    v2_ref[:, :L, :] = v
    v2_ref[:, L:, :] = v
    wo = wo_ref[...].astype(jnp.bfloat16)                 # (d_model, Dv)
    bo = bo_ref[...]                                      # (1, d_model)

    for b in range(bt):                                   # static, small
        gb = bi * bt + b
        agg = jnp.zeros((L, v.shape[-1]), jnp.float32)
        for i in range(top_k):                            # static, small
            dly = delay_ref[gb, i]
            wgt = corr_ref[gb, i]
            # rows t of this slice are v[b, (t + delay) % L, :]
            agg = agg + wgt * v2_ref[b, pl.ds(dly, L), :]
        y = lax.dot_general(agg.astype(jnp.bfloat16), wo,
                            (((1,), (1,)), ((), ())),
                            preferred_element_type=jnp.float32)      # (L, d_model)
        o_ref[b, :, :] = (y + bo).astype(o_ref.dtype)


def pallas_agg_out(delay, tmp_corr, v, wo, bo):
    B, L, Dv = v.shape
    d_model = wo.shape[0]
    top_k = delay.shape[1]
    bt = _pick_batch_tile(B)
    kern = functools.partial(_agg_out_kernel, L=L, top_k=top_k, bt=bt)
    grid_spec = pltpu.PrefetchScalarGridSpec(
        num_scalar_prefetch=1,                            # delay table -> SMEM
        grid=(B // bt,),
        in_specs=[
            pl.BlockSpec(memory_space=pltpu.MemorySpace.SMEM),       # softmax weights
            pl.BlockSpec((bt, L, Dv), lambda i, dref: (i, 0, 0)),
            pl.BlockSpec((d_model, Dv), lambda i, dref: (0, 0)),
            pl.BlockSpec((1, d_model), lambda i, dref: (0, 0)),
        ],
        out_specs=pl.BlockSpec((bt, L, d_model), lambda i, dref: (i, 0, 0)),
        scratch_shapes=[pltpu.VMEM((bt, 2 * L, Dv), jnp.float32)],
    )
    return pl.pallas_call(
        kern,
        out_shape=jax.ShapeDtypeStruct((B, L, d_model), jnp.float32),
        grid_spec=grid_spec,
        compiler_params=pltpu.CompilerParams(
            dimension_semantics=("parallel",)),
    )(delay, tmp_corr, v, wo, bo.reshape(1, d_model))


# ------------------------------ Layer (glue) --------------------------------

def init_params(key, d_model, n_heads, d_keys=None, d_values=None):
    d_keys = d_keys or d_model // n_heads
    d_values = d_values or d_model // n_heads
    ks = jax.random.split(key, 8)

    def lin(kw, kb, out_f, in_f):
        bound = 1.0 / math.sqrt(in_f)
        w = jax.random.uniform(kw, (out_f, in_f), jnp.float32, -bound, bound)
        b = jax.random.uniform(kb, (out_f,), jnp.float32, -bound, bound)
        return w, b

    return {
        "q": lin(ks[0], ks[1], d_keys * n_heads, d_model),
        "k": lin(ks[2], ks[3], d_keys * n_heads, d_model),
        "v": lin(ks[4], ks[5], d_values * n_heads, d_model),
        "o": lin(ks[6], ks[7], d_model, d_values * n_heads),
    }


def auto_correlation_layer(params, queries, keys, values, attn_mask=None,
                           *, n_heads=4, factor=1):
    """Forward pass of FEDformer's AutoCorrelationLayer (inference-mode
    AutoCorrelation, output_attention=False -> attn is None)."""
    del attn_mask, n_heads  # mask ignored; head split/merge is a no-op on flat features
    B, L, _ = queries.shape
    _, S, _ = keys.shape

    wq, bq = params["q"]
    wk, bk = params["k"]
    wv, bv = params["v"]
    wo, bo = params["o"]
    Nq, Nk, Nv = wq.shape[0], wk.shape[0], wv.shape[0]

    # ---- projections: fuse Q/K/V into one tiled matmul when they share an input
    # (FEDformer self-attention); fuse K/V for cross-attention.
    if queries is keys and keys is values:
        w_cat = jnp.concatenate([wq, wk, wv], axis=0)
        b_cat = jnp.concatenate([bq, bk, bv], axis=0)
        qkv = pallas_linear(queries.reshape(B * L, -1), w_cat, b_cat)
        q = qkv[:, :Nq].reshape(B, L, Nq)
        k = qkv[:, Nq:Nq + Nk].reshape(B, L, Nk)
        v = qkv[:, Nq + Nk:].reshape(B, L, Nv)
    else:
        q = pallas_linear(queries.reshape(B * L, -1), wq, bq).reshape(B, L, Nq)
        if keys is values:
            w_cat = jnp.concatenate([wk, wv], axis=0)
            b_cat = jnp.concatenate([bk, bv], axis=0)
            kv = pallas_linear(keys.reshape(B * S, -1), w_cat, b_cat)
            k = kv[:, :Nk].reshape(B, S, Nk)
            v = kv[:, Nk:].reshape(B, S, Nv)
        else:
            k = pallas_linear(keys.reshape(B * S, -1), wk, bk).reshape(B, S, Nk)
            v = pallas_linear(values.reshape(B * S, -1), wv, bv).reshape(B, S, Nv)

    # ---- align key/value time length to the query length (as in AutoCorrelation).
    if L > S:
        k = jnp.concatenate([k, jnp.zeros((B, L - S, Nk), k.dtype)], axis=1)
        v = jnp.concatenate([v, jnp.zeros((B, L - S, Nv), v.dtype)], axis=1)
    else:
        k = k[:, :L]
        v = v[:, :L]

    # ---- circular autocorrelation averaged over heads & channels (Pallas kernel).
    mean_value = pallas_corr_mean(q, k)                    # (B, L) f32

    # ---- top-k delay selection + softmax (tiny (B,L)/(B,k) tensors: XLA glue).
    # NOTE: torch uses int(factor*log(L)); max(1, ...) only differs for degenerate L < e.
    top_k = max(1, int(factor * math.log(L)))
    weights, delay = lax.top_k(mean_value, top_k)          # (B, top_k)
    tmp_corr = jax.nn.softmax(weights, axis=-1).astype(jnp.float32)

    # ---- fused time-delay aggregation + output projection (Pallas kernel).
    out = pallas_agg_out(delay.astype(jnp.int32), tmp_corr, v, wo, bo)
    # TODO(synk): output_attention=True branch (returning the full corr tensor) not
    # wired; matches the default output_attention=False -> attn is None.
    return out, None


# --------------------------------- Main --------------------------------------

if __name__ == "__main__":
    key = jax.random.PRNGKey(0)
    B, L, S, d_model, n_heads = 2, 16, 16, 32, 4

    kq, kk, kv_, kp = jax.random.split(key, 4)
    queries = jax.random.normal(kq, (B, L, d_model), jnp.float32)
    keys_in = jax.random.normal(kk, (B, S, d_model), jnp.float32)
    values_in = jax.random.normal(kv_, (B, S, d_model), jnp.float32)

    params = init_params(kp, d_model, n_heads)

    # cross-attention style call (distinct q/k/v tensors)
    out, attn = auto_correlation_layer(params, queries, keys_in, values_in, None,
                                       n_heads=n_heads, factor=1)
    out = jax.block_until_ready(out)
    assert out.shape == (B, L, d_model) and attn is None
    assert bool(jnp.all(jnp.isfinite(out)))

    # self-attention style call (same tensor) exercises the fused QKV projection
    out2, _ = auto_correlation_layer(params, queries, queries, queries, None,
                                     n_heads=n_heads, factor=1)
    out2 = jax.block_until_ready(out2)
    assert out2.shape == (B, L, d_model)
    assert bool(jnp.all(jnp.isfinite(out2)))

    print("KERNEL_OK")
</pallas_src>

<mosaic_0001>
module attributes {stable_mosaic.version = 11 : i64} {
  func.func @_linear_kernel(%arg0: i32, %arg1: memref<32x32xf32, #tpu.memory_space<vmem>>, %arg2: memref<32x32xf32, #tpu.memory_space<vmem>>, %arg3: memref<1x32xf32, #tpu.memory_space<vmem>>, %arg4: memref<32x32xf32, #tpu.memory_space<vmem>>) attributes {dimension_semantics = [#tpu.dimension_semantics<parallel>], iteration_bounds = array<i64: 1>, scalar_prefetch = 0 : i64, scratch_operands = 0 : i64, tpu.core_type = #tpu.core_type<tc>, window_params = [{transform_indices = @transform_0, window_bounds = array<i64: 32, 32>}, {pipeline_mode = #tpu.pipeline_mode<synchronous>, transform_indices = @transform_1, window_bounds = array<i64: 32, 32>}, {pipeline_mode = #tpu.pipeline_mode<synchronous>, transform_indices = @transform_2, window_bounds = array<i64: 1, 32>}, {transform_indices = @transform_3, window_bounds = array<i64: 32, 32>}]} {
    %c0 = arith.constant 0 : index
    %c0_0 = arith.constant 0 : index
    %0 = vector.load %arg1[%c0, %c0_0] : memref<32x32xf32, #tpu.memory_space<vmem>>, vector<32x32xf32>
    %1 = arith.truncf %0 : vector<32x32xf32> to vector<32x32xbf16>
    %c0_1 = arith.constant 0 : index
    %c0_2 = arith.constant 0 : index
    %2 = vector.load %arg2[%c0_1, %c0_2] : memref<32x32xf32, #tpu.memory_space<vmem>>, vector<32x32xf32>
    %3 = arith.truncf %2 : vector<32x32xf32> to vector<32x32xbf16>
    %cst = arith.constant dense<0.000000e+00> : vector<32x32xf32>
    %4 = tpu.matmul %1, %3, %cst {dimension_numbers = #tpu.dot_dimension_numbers<[1], [1], [0], [0], [0, 0, 1, 0], [], []>} : vector<32x32xbf16>, vector<32x32xbf16>, vector<32x32xf32> -> vector<32x32xf32>
    %c0_3 = arith.constant 0 : index
    %c0_4 = arith.constant 0 : index
    %5 = vector.load %arg3[%c0_3, %c0_4] : memref<1x32xf32, #tpu.memory_space<vmem>>, vector<1x32xf32>
    %6 = vector.broadcast %5 : vector<1x32xf32> to vector<32x32xf32>
    %7 = arith.addf %4, %6 : vector<32x32xf32>
    %c0_5 = arith.constant 0 : index
    %c0_6 = arith.constant 0 : index
    %8 = vector.load %arg4[%c0_5, %c0_6] : memref<32x32xf32, #tpu.memory_space<vmem>>, vector<32x32xf32>
    tpu.vector_store %arg4[%c0_5, %c0_6], %7 {strides = array<i32>} : memref<32x32xf32, #tpu.memory_space<vmem>>, vector<32x32xf32>,
    return
  }
  func.func @transform_0(%arg0: i32) -> (i32, i32) {
    %c0_i32 = arith.constant 0 : i32
    %c0_i32_0 = arith.constant 0 : i32
    return %arg0, %c0_i32 : i32, i32
  }
  func.func @transform_1(%arg0: i32) -> (i32, i32) {
    %c0_i32 = arith.constant 0 : i32
    %c0_i32_0 = arith.constant 0 : i32
    %c0_i32_1 = arith.constant 0 : i32
    return %c0_i32, %c0_i32_0 : i32, i32
  }
  func.func @transform_2(%arg0: i32) -> (i32, i32) {
    %c0_i32 = arith.constant 0 : i32
    %c0_i32_0 = arith.constant 0 : i32
    %c0_i32_1 = arith.constant 0 : i32
    return %c0_i32, %c0_i32_0 : i32, i32
  }
  func.func @transform_3(%arg0: i32) -> (i32, i32) {
    %c0_i32 = arith.constant 0 : i32
    %c0_i32_0 = arith.constant 0 : i32
    return %arg0, %c0_i32 : i32, i32
  }
}

</mosaic_0001>

<llo_original>
// kernel: tpu_custom_call.1
$region0: #{tpu_custom_call.1}
  #allocation0 [shape = 'u32[]', space=smem, size = 0x4, offset = 0x4, fixed_abs, tag = 'smem constant byte address 0x4 - core index']
  #allocation1 [shape = 'u32[144,128]{1,0:T(1,128)}', space=vmem, size = 0x12000, scoped, tag = 'internal scratch']
  %s0 = inlined_call_operand.hbm [shape: f32[32,32], index: 0, kind: input, shape index: {}]
  %s1 = inlined_call_operand.hbm [shape: f32[32,32], index: 1, kind: input, shape index: {}]
  %s2 = inlined_call_operand.vmem [shape: f32[1,32], index: 2, kind: input, shape index: {}]
  %s3 = inlined_call_operand.hbm [shape: f32[32,32], index: 3, kind: output, shape index: {}]
  %s4 = sld [smem:[#allocation0]]
  $region30: #{tpu_custom_call.1} parent=0
    _
  %s6 = ssub.s32 1, %s4
  %s7 = scalar_select 0, %s6, %s4
  $region1: #{tpu_custom_call.1} parent=0
    #allocation2 [shape = 'u8[16384]{0}', space=vmem, size = 0x4000, scoped, tag = 'input window, operand 0, single buffered']
    #allocation3 [shape = 's32[1]{0}', space=sflag, size = 0x4, scoped, tag = 'scoped memory for tpu_custom_call.1']
    #allocation4 [shape = 's32[1]{0}', space=sflag, size = 0x4, scoped, tag = 'scoped memory for tpu_custom_call.1']
    #allocation5 [shape = 'u8[16384]{0}', space=vmem, size = 0x4000, scoped, tag = 'input window, operand 1, single buffered']
    #allocation6 [shape = 's32[1]{0}', space=sflag, size = 0x4, scoped, tag = 'scoped memory for tpu_custom_call.1']
    #allocation7 [shape = 'u8[16384]{0}', space=vmem, size = 0x4000, scoped, tag = 'output window, operand 0, single buffered']
    %8 = vsyncpa [#allocation3], 0
    %9 = vsyncpa [#allocation6], 0
    %10 = vsyncpa [#allocation4], 0
    // Predicated region
    $region2: #{tpu_custom_call.1} parent=1 // pred_check
      _
    $region3: #{tpu_custom_call.1} parent=1 // pred_check_branch
      %12 = sbr.rel (0) target = $region5
    $region4: #{tpu_custom_call.1} parent=1 // pred_region
      %s14 = ssub.s32 512, 512
      %15 = vsyncadd [#allocation3], %s14
      %s16 = sshll.u32 [#allocation2], 4
      %s17 = int_to_ptr.vmem [resolvable:$true] %s16
      %22 = dma.hbm_to_vmem [thread:$0]  %s0, 512, %s17, [#allocation3], 128, 128, 8
    $region5: #{tpu_custom_call.1} parent=1 // pred_fallthru
      _
    // Predicated region
    $region6: #{tpu_custom_call.1} parent=1 // pred_check
      _
    $region7: #{tpu_custom_call.1} parent=1 // pred_check_branch
      %24 = sbr.rel (0) target = $region9
    $region8: #{tpu_custom_call.1} parent=1 // pred_region
      %s26 = ssub.s32 512, 512
      %27 = vsyncadd [#allocation6], %s26
      %s28 = sshll.u32 [#allocation5], 4
      %s29 = int_to_ptr.vmem [resolvable:$true] %s28
      %34 = dma.hbm_to_vmem [thread:$0]  %s1, 512, %s29, [#allocation6], 128, 128, 8
    $region9: #{tpu_custom_call.1} parent=1 // pred_fallthru
      _
    // Predicated region
    $region10: #{tpu_custom_call.1} parent=1 // pred_check
      _
    $region11: #{tpu_custom_call.1} parent=1 // pred_check_branch
      %36 = sbr.rel (0) target = $region13
    $region12: #{tpu_custom_call.1} parent=1 // pred_region
      _
    $region13: #{tpu_custom_call.1} parent=1 // pred_fallthru
      _
    // Predicated region
    $region14: #{tpu_custom_call.1} parent=1 // pred_check
      _
    $region15: #{tpu_custom_call.1} parent=1 // pred_check_branch
      %38 = sbr.rel (0) target = $region17
    $region16: #{tpu_custom_call.1} parent=1 // pred_region
      %39 = dma.done [#allocation3], 512
    $region17: #{tpu_custom_call.1} parent=1 // pred_fallthru
      _
    // Predicated region
    $region18: #{tpu_custom_call.1} parent=1 // pred_check
      _
    $region19: #{tpu_custom_call.1} parent=1 // pred_check_branch
      %41 = sbr.rel (0) target = $region21
    $region20: #{tpu_custom_call.1} parent=1 // pred_region
      %42 = dma.done [#allocation6], 512
    $region21: #{tpu_custom_call.1} parent=1 // pred_fallthru
      _
    %v44 = vld [vmem:[#allocation2] sm:$0xff]
    %v45 = vld [vmem:[#allocation2 + $0x8] sm:$0xff]
    %v46 = vld [vmem:[#allocation2 + $0x10] sm:$0xff]
    %v47 = vld [vmem:[#allocation2 + $0x18] sm:$0xff]
    %v48 = vpack.c.bf16 %v45, %v44
    %v49 = vpack.c.bf16 %v47, %v46
    %v50 = vld [vmem:[#allocation5] sm:$0xff]
    %v51 = vld [vmem:[#allocation5 + $0x8] sm:$0xff]
    %v52 = vld [vmem:[#allocation5 + $0x10] sm:$0xff]
    %v53 = vld [vmem:[#allocation5 + $0x18] sm:$0xff]
    %v54 = vpack.c.bf16 %v51, %v50
    %v55 = vpack.c.bf16 %v53, %v52
    %v56 = vld [vmem:[%s2] sm:$0x1]
    %v58 = vlaneseq
    %v59 = vshrl.u32 %v58, 7
    %v60 = vsub.s32 0, %v59
    %v61 = vrot.slane %v56, %v60
    %vm63 = vcmask 261120
    %v65 = vsel %vm63, %v48, 0
    %v68 = vsel %vm63, %v49, 0
    %v71 = vsel %vm63, %v54, 0
    %v74 = vsel %vm63, %v55, 0
    %76 = vmatprep.subr.bf16.mxu0 0
    %77 = vmatpush1.bf16.xpose.msra.mxu0 0
    %78 = vmatprep.subr.bf16.mxu0 0
    %79 = vmatpush1.bf16.xpose.msra.mxu0 0
    %80 = vmatprep.subr.bf16.mxu0 0
    %81 = vmatpush1.bf16.xpose.msra.mxu0 0
    %82 = vmatprep.subr.bf16.mxu0 0
    %83 = vmatpush1.bf16.xpose.msra.mxu0 0
    %84 = vmatprep.subr.bf16.mxu0 0
    %85 = vmatpush1.bf16.xpose.msra.mxu0 0
    %86 = vmatprep.subr.bf16.mxu0 0
    %87 = vmatpush1.bf16.xpose.msra.mxu0 0
    %88 = vmatprep.subr.bf16.mxu0 0
    %89 = vmatpush1.bf16.xpose.msra.mxu0 %v74
    %90 = vmatprep.subr.bf16.mxu0 0
    %91 = vmatpush1.bf16.xpose.msra.mxu0 %v71
    %92 = vmatprep.subr.bf16.mxu0 0
    %93 = vmatpush2.bf16.xpose.msra.mxu0 0
    %94 = vmatprep.subr.bf16.mxu0 0
    %95 = vmatpush2.bf16.xpose.msra.mxu0 0
    %96 = vmatprep.subr.bf16.mxu0 0
    %97 = vmatpush2.bf16.xpose.msra.mxu0 0
    %98 = vmatprep.subr.bf16.mxu0 0
    %99 = vmatpush2.bf16.xpose.msra.mxu0 0
    %100 = vmatprep.subr.bf16.mxu0 0
    %101 = vmatpush2.bf16.xpose.msra.mxu0 0
    %102 = vmatprep.subr.bf16.mxu0 0
    %103 = vmatpush2.bf16.xpose.msra.mxu0 0
    %104 = vmatprep.subr.bf16.mxu0 0
    %105 = vmatpush2.bf16.xpose.msra.mxu0 0
    %106 = vmatprep.subr.bf16.mxu0 0
    %107 = vmatpush2.bf16.xpose.msra.mxu0 0
    %108 = vmatprep.mubr.bf16.mxu0 0
    %109 = vmatmul.mubr.bf16.gmra.mxu0 %v65
    %v110 = vpop.f32.mrf.mxu0
    %v111 = vadd.f32 %v61, %v110
    %v112 = vpop.f32.mrf.mxu0
    %v113 = vpop.f32.mrf.mxu0
    %v114 = vadd.f32 %v61, %v113
    %v115 = vpop.f32.mrf.mxu0
    %116 = vmatprep.mubr.bf16.mxu0 0
    %117 = vmatmul.mubr.bf16.gmra.mxu0 %v68
    %v118 = vpop.f32.mrf.mxu0
    %v119 = vadd.f32 %v61, %v118
    %v120 = vpop.f32.mrf.mxu0
    %v121 = vpop.f32.mrf.mxu0
    %v122 = vadd.f32 %v61, %v121
    %v123 = vpop.f32.mrf.mxu0
    %124 = vdwg.mxu0
    %125 = vst.msk [vmem:[#allocation7] sm:$0xff] %vm63, %v111
    %126 = vst.msk [vmem:[#allocation7 + $0x8] sm:$0xff] %vm63, %v114
    %127 = vst.msk [vmem:[#allocation7 + $0x10] sm:$0xff] %vm63, %v119
    %128 = vst.msk [vmem:[#allocation7 + $0x18] sm:$0xff] %vm63, %v122
    // Predicated region
    $region22: #{tpu_custom_call.1} parent=1 // pred_check
      _
    $region23: #{tpu_custom_call.1} parent=1 // pred_check_branch
      %130 = sbr.rel (0) target = $region25
    $region24: #{tpu_custom_call.1} parent=1 // pred_region
      %s132 = ssub.s32 512, 512
      %133 = vsyncadd [#allocation4], %s132
      %s134 = sshll.u32 [#allocation7], 4
      %s135 = int_to_ptr.vmem [resolvable:$true] %s134
      %140 = dma.vmem_to_hbm [thread:$0]  %s135, 512, %s3, [#allocation4], 128, 128, 8
    $region25: #{tpu_custom_call.1} parent=1 // pred_fallthru
      _
    // Predicated region
    $region26: #{tpu_custom_call.1} parent=1 // pred_check
      _
    $region27: #{tpu_custom_call.1} parent=1 // pred_check_branch
      %142 = sbr.rel (0) target = $region29
    $region28: #{tpu_custom_call.1} parent=1 // pred_region
      %143 = dma.done [#allocation4], 512
    $region29: #{tpu_custom_call.1} parent=1 // pred_fallthru
      _
    %144 = vsyncpa [#allocation3], 1
    %145 = vsyncpa [#allocation6], 1
    %146 = vsyncpa [#allocation4], 1

</llo_original>
